<compile_context>
chip_gen: v7x
topology: tpu7x:2x2x1
jax: 0.10.0
libtpu: 0.0.40
codegen_flags: <defaults>
</compile_context>

<pallas_src>
import functools

import jax
import jax.numpy as jnp
from jax.experimental import pallas as pl
from jax.experimental.pallas import tpu as pltpu


# --- activations (mirror get_activation; lrelu_param default is 0.2) ----------
_ACTIVATIONS = {
    None: lambda x: x,
    "tanh": jnp.tanh,
    "sigmoid": jax.nn.sigmoid,
    "relu": lambda x: jnp.maximum(x, 0),
    "lrelu": lambda x: jnp.where(x >= 0, x, 0.2 * x),
}

# Conservative "table lives in VMEM" budget, safe on all generations
# (v7x: 64 MiB physical; v5e/v6e: 128 MiB physical, 16/32 MiB scoped default
# which we raise explicitly via vmem_limit_bytes).
_FAST_PATH_MAX_BYTES = 28 << 20


def _round_up(x, m):
    return (x + m - 1) // m * m


# --- frame path, fast: table resident in VMEM ----------------------------------
def _gather_vmem_kernel(act_fn, rows, row_ids_ref, table_hbm, out_ref,
                        tbl_vmem, blk, sem):
    """Bulk-copy the whole flattened table HBM->VMEM once (grid step 0), then
    gather `rows` rows per step with in-VMEM dynamic slices and emit one dense
    (rows, D) activated store."""
    g = pl.program_id(0)

    @pl.when(g == 0)
    def _():
        cp = pltpu.make_async_copy(table_hbm, tbl_vmem, sem)
        cp.start()
        cp.wait()

    base = g * rows
    for i in range(rows):
        blk[pl.ds(i, 1), :] = tbl_vmem[pl.ds(row_ids_ref[base + i], 1), :]
    out_ref[...] = act_fn(blk[...]).astype(out_ref.dtype)


# --- frame path, slow: manual double-buffered HBM row gather --------------------
def _gather_hbm_kernel(act_fn, rows, row_ids_ref, table_hbm, out_ref, buf, sems):
    """Per grid step: rows for step g were prefetched into slot g%2 by the
    previous step (or primed at g==0); issue the NEXT step's row DMAs into the
    other slot, then wait + activate + one dense (rows, D) store."""
    g = pl.program_id(0)
    nb = pl.num_programs(0)
    slot = g % 2

    def issue(step, slot_):
        base = step * rows
        for i in range(rows):
            pltpu.make_async_copy(
                table_hbm.at[pl.ds(row_ids_ref[base + i], 1)],
                buf.at[slot_, pl.ds(i, 1)],
                sems.at[slot_, i],
            ).start()

    @pl.when(g == 0)
    def _():
        issue(0, 0)                      # prime the first slot

    @pl.when(g + 1 < nb)
    def _():
        issue(g + 1, 1 - slot)           # prefetch next step before waiting

    # Wait for this step's rows; descriptors are shape-only (no SMEM re-reads).
    for i in range(rows):
        pltpu.make_async_copy(
            table_hbm.at[pl.ds(0, 1)],
            buf.at[slot, pl.ds(i, 1)],
            sems.at[slot, i],
        ).wait()

    out_ref[...] = act_fn(buf[slot]).astype(out_ref.dtype)


# --- seq-only path kernels ------------------------------------------------------
def _seq_copy_kernel(seq_ref, table_hbm, out_hbm, sems):
    """Identity gather: pipelined HBM -> HBM DMA of table[seq_idx[b]] into out[b].
    Start copy b, wait on copy b-1, drain the last copy on the final step."""
    b = pl.program_id(0)
    nb = pl.num_programs(0)
    slot = b % 2

    pltpu.make_async_copy(
        table_hbm.at[pl.ds(seq_ref[b], 1)],
        out_hbm.at[pl.ds(b, 1)],
        sems.at[slot],
    ).start()

    @pl.when(b > 0)
    def _():
        pltpu.make_async_copy(
            table_hbm.at[pl.ds(0, 1)],           # shape-only stand-in for wait
            out_hbm.at[pl.ds(b - 1, 1)],
            sems.at[1 - slot],
        ).wait()

    @pl.when(b == nb - 1)
    def _():
        pltpu.make_async_copy(
            table_hbm.at[pl.ds(0, 1)],
            out_hbm.at[pl.ds(b, 1)],
            sems.at[slot],
        ).wait()


def _seq_act_kernel(act_fn, seq_ref, table_ref, out_ref):
    """Gather + activation on an N-tiled (1, tn, D) block (auto-pipelined)."""
    del seq_ref  # only used by the index_map
    out_ref[...] = act_fn(table_ref[...]).astype(out_ref.dtype)


# --- wrapper --------------------------------------------------------------------
def lookup_table_forward(table, seq_idx, frame_idx=None, activation=None,
                         rows_per_block=None, seq_rows_per_block=None,
                         max_vmem_table_bytes=_FAST_PATH_MAX_BYTES):
    act_fn = _ACTIVATIONS[activation]
    S, N, D = table.shape
    B = seq_idx.shape[0]
    itemsize = table.dtype.itemsize
    Dp = _round_up(D, 128)   # NOTE: D a multiple of 128 keeps all stores lane-dense

    # Clamp indices: PyTorch raises on OOB; here an OOB index would drive an
    # unchecked HBM DMA / VMEM slice, so keep the kernels safe by clamping.
    seq_idx = jnp.clip(seq_idx.astype(jnp.int32), 0, S - 1)

    if frame_idx is None:
        if activation is None:
            # Pure gather: pipelined HBM -> HBM DMA per batch element.
            return pl.pallas_call(
                _seq_copy_kernel,
                out_shape=jax.ShapeDtypeStruct((B, N, D), table.dtype),
                grid_spec=pltpu.PrefetchScalarGridSpec(
                    num_scalar_prefetch=1,
                    grid=(B,),
                    in_specs=[pl.BlockSpec(memory_space=pl.ANY)],
                    out_specs=pl.BlockSpec(memory_space=pl.ANY),
                    scratch_shapes=[pltpu.SemaphoreType.DMA((2,))],
                ),
                compiler_params=pltpu.CompilerParams(
                    dimension_semantics=("arbitrary",),
                    has_side_effects=True),
            )(seq_idx, table)

        # Gather + activation with N tiled into (1, tn, D) blocks (~4 MiB each)
        # so large N*D respects v7x's 64 MiB / v5e's 16 MiB-scoped VMEM.
        row_bytes = max(1, D * itemsize)
        if seq_rows_per_block is not None:
            tn = max(8, _round_up(min(seq_rows_per_block, N), 8))
        else:
            tn = max(8, ((4 << 20) // row_bytes) // 8 * 8)
        if tn >= N:
            tn = N
        grid_n = pl.cdiv(N, tn)
        vmem_limit = int(min(max(4 * tn * Dp * itemsize + (2 << 20), 16 << 20),
                             48 << 20))
        return pl.pallas_call(
            functools.partial(_seq_act_kernel, act_fn),
            out_shape=jax.ShapeDtypeStruct((B, N, D), table.dtype),
            grid_spec=pltpu.PrefetchScalarGridSpec(
                num_scalar_prefetch=1,
                grid=(B, grid_n),
                in_specs=[pl.BlockSpec((1, tn, D),
                                       lambda b, n, seq: (seq[b], n, 0))],
                out_specs=pl.BlockSpec((1, tn, D),
                                       lambda b, n, seq: (b, n, 0)),
            ),
            compiler_params=pltpu.CompilerParams(
                dimension_semantics=("parallel", "parallel"),
                vmem_limit_bytes=vmem_limit),
        )(seq_idx, table)

    # ---- frame path: row gather ----
    frame_idx = jnp.clip(frame_idx.astype(jnp.int32), 0, N - 1)
    F = frame_idx.shape[1]
    R = B * F

    # Flattened (B*F,) 1-D row ids into the (S*N, D) table view.
    row_ids = (jnp.repeat(seq_idx, F) * N + frame_idx.reshape(-1)).astype(jnp.int32)

    if rows_per_block is not None:
        rows = max(8, _round_up(rows_per_block, 8))
    else:
        # Amortize per-step overhead, but keep >=4 grid steps for large R.
        rows = min(256, _round_up(max(R // 4, 8), 8))
    R_pad = _round_up(R, rows)
    if R_pad != R:
        # Padded rows gather row 0 (valid) and are sliced off afterwards.
        row_ids = jnp.concatenate([row_ids, jnp.zeros((R_pad - R,), jnp.int32)])

    table_flat = table.reshape(S * N, D)   # metadata-only reshape outside pallas_call

    # VMEM footprint of the table-resident fast path:
    #   padded table + (rows, D) block scratch + double-buffered output block.
    tbl_bytes = _round_up(S * N, 8) * Dp * itemsize
    blk_bytes = rows * Dp * itemsize
    fast_bytes = tbl_bytes + 3 * blk_bytes

    if fast_bytes <= max_vmem_table_bytes:
        vmem_limit = int(max(fast_bytes + (4 << 20), 16 << 20))
        out_flat = pl.pallas_call(
            functools.partial(_gather_vmem_kernel, act_fn, rows),
            out_shape=jax.ShapeDtypeStruct((R_pad, D), table.dtype),
            grid_spec=pltpu.PrefetchScalarGridSpec(
                num_scalar_prefetch=1,
                grid=(R_pad // rows,),
                in_specs=[pl.BlockSpec(memory_space=pl.ANY)],
                out_specs=pl.BlockSpec((rows, D), lambda g, ids: (g, 0)),
                scratch_shapes=[
                    pltpu.VMEM((S * N, D), table.dtype),
                    pltpu.VMEM((rows, D), table.dtype),
                    pltpu.SemaphoreType.DMA(()),
                ],
            ),
            compiler_params=pltpu.CompilerParams(
                dimension_semantics=("arbitrary",),   # table loaded at step 0 only
                vmem_limit_bytes=vmem_limit),
        )(row_ids, table_flat)
    else:
        out_flat = pl.pallas_call(
            functools.partial(_gather_hbm_kernel, act_fn, rows),
            out_shape=jax.ShapeDtypeStruct((R_pad, D), table.dtype),
            grid_spec=pltpu.PrefetchScalarGridSpec(
                num_scalar_prefetch=1,
                grid=(R_pad // rows,),
                in_specs=[pl.BlockSpec(memory_space=pl.ANY)],
                out_specs=pl.BlockSpec((rows, D), lambda g, ids: (g, 0)),
                scratch_shapes=[
                    pltpu.VMEM((2, rows, D), table.dtype),
                    pltpu.SemaphoreType.DMA((2, rows)),
                ],
            ),
            compiler_params=pltpu.CompilerParams(
                dimension_semantics=("arbitrary",)),  # double-buffer carries state
        )(row_ids, table_flat)

    return out_flat[:R].reshape(B, F, D)


# --- pure-JAX reference -----------------------------------------------------------
def lookup_table_reference(table, seq_idx, frame_idx=None, activation=None):
    out = table[seq_idx]
    if frame_idx is not None:
        out = out[jnp.arange(seq_idx.shape[0])[:, None], frame_idx]
    return _ACTIVATIONS[activation](out)


if __name__ == "__main__":
    # Small shapes consistent with LookupTable(size=(S, N, D)):
    S, N, D = 6, 16, 128     # (num_seqs, num_frames, feat)
    B, F = 2, 8              # batch of sequence indices, frames per sequence

    key = jax.random.PRNGKey(0)
    k_tbl, k_seq, k_frm = jax.random.split(key, 3)

    # nn.Parameter(torch.zeros(size)) initializes to zeros; use a random table
    # so the gather paths are actually verifiable.
    table = jax.random.normal(k_tbl, (S, N, D), dtype=jnp.float32)
    seq_idx = jax.random.randint(k_seq, (B,), 0, S, dtype=jnp.int32)
    frame_idx = jax.random.randint(k_frm, (B, F), 0, N, dtype=jnp.int32)

    # frame gather + tanh (VMEM-resident fast path, 2 grid steps)
    out = jax.block_until_ready(lookup_table_forward(table, seq_idx, frame_idx, "tanh"))
    ref = lookup_table_reference(table, seq_idx, frame_idx, "tanh")
    assert out.shape == (B, F, D)
    assert jnp.allclose(out, ref, atol=1e-6, rtol=1e-6)

    # frame gather + lrelu, forced manual double-buffered HBM row-gather path
    out_s = jax.block_until_ready(lookup_table_forward(
        table, seq_idx, frame_idx, "lrelu",
        rows_per_block=8, max_vmem_table_bytes=0))
    ref_s = lookup_table_reference(table, seq_idx, frame_idx, "lrelu")
    assert jnp.allclose(out_s, ref_s, atol=1e-6, rtol=1e-6)

    # frame gather, no activation
    out_n = jax.block_until_ready(lookup_table_forward(table, seq_idx, frame_idx, None))
    ref_n = lookup_table_reference(table, seq_idx, frame_idx, None)
    assert jnp.allclose(out_n, ref_n)

    # seq-only, no activation (pipelined HBM->HBM DMA path)
    out2 = jax.block_until_ready(lookup_table_forward(table, seq_idx, None, None))
    ref2 = lookup_table_reference(table, seq_idx, None, None)
    assert out2.shape == (B, N, D)
    assert jnp.allclose(out2, ref2)

    # seq-only + sigmoid, N tiled into (1, 8, D) blocks (2 N-blocks per batch)
    out3 = jax.block_until_ready(lookup_table_forward(
        table, seq_idx, None, "sigmoid", seq_rows_per_block=8))
    ref3 = lookup_table_reference(table, seq_idx, None, "sigmoid")
    assert jnp.allclose(out3, ref3, atol=1e-6, rtol=1e-6)

    print("KERNEL_OK")
</pallas_src>

<mosaic_0001>
module attributes {stable_mosaic.version = 11 : i64} {
  func.func @_gather_vmem_kernel(%arg0: i32, %arg1: memref<16xi32, #tpu.memory_space<smem>>, %arg2: memref<96x128xf32, #tpu.memory_space<any>>, %arg3: memref<8x128xf32, #tpu.memory_space<vmem>>, %arg4: memref<96x128xf32, #tpu.memory_space<vmem>>, %arg5: memref<8x128xf32, #tpu.memory_space<vmem>>, %arg6: memref<!tpu.dma_semaphore, #tpu.memory_space<semaphore_mem>>) attributes {dimension_semantics = [#tpu.dimension_semantics<arbitrary>], iteration_bounds = array<i64: 2>, scalar_prefetch = 1 : i64, scratch_operands = 3 : i64, tpu.core_type = #tpu.core_type<tc>, window_params = [{}, {transform_indices = @transform_1, window_bounds = array<i64: 8, 128>}]} {
    %c0_i32 = arith.constant 0 : i32
    %0 = arith.cmpi eq, %arg0, %c0_i32 : i32
    %1 = arith.extui %0 : i1 to i32
    %c0_i32_0 = arith.constant 0 : i32
    %2 = arith.cmpi ne, %1, %c0_i32_0 : i32
    scf.if %2 {
      tpu.enqueue_dma source(%arg2 : memref<96x128xf32, #tpu.memory_space<any>>) target(%arg4 : memref<96x128xf32, #tpu.memory_space<vmem>>) target_semaphore(%arg6 : memref<!tpu.dma_semaphore, #tpu.memory_space<semaphore_mem>>)
      tpu.wait_dma2 semaphore(%arg6 : memref<!tpu.dma_semaphore, #tpu.memory_space<semaphore_mem>>) src(%arg2 : memref<96x128xf32, #tpu.memory_space<any>>) dst(%arg4 : memref<96x128xf32, #tpu.memory_space<vmem>>)
    } else {
    }
    %c8_i32 = arith.constant 8 : i32
    %3 = arith.muli %arg0, %c8_i32 : i32
    %c0_i32_1 = arith.constant 0 : i32
    %4 = arith.addi %3, %c0_i32_1 : i32
    %5 = arith.index_cast %4 : i32 to index
    %6 = memref.load %arg1[%5] : memref<16xi32, #tpu.memory_space<smem>>
    %7 = arith.index_cast %6 : i32 to index
    %c0 = arith.constant 0 : index
    %8 = vector.load %arg4[%7, %c0] : memref<96x128xf32, #tpu.memory_space<vmem>>, vector<1x128xf32>
    %c0_2 = arith.constant 0 : index
    %c0_3 = arith.constant 0 : index
    %9 = vector.load %arg5[%c0_2, %c0_3] : memref<8x128xf32, #tpu.memory_space<vmem>>, vector<1x128xf32>
    tpu.vector_store %arg5[%c0_2, %c0_3], %8 {strides = array<i32>} : memref<8x128xf32, #tpu.memory_space<vmem>>, vector<1x128xf32>,
    %c1_i32 = arith.constant 1 : i32
    %10 = arith.addi %3, %c1_i32 : i32
    %11 = arith.index_cast %10 : i32 to index
    %12 = memref.load %arg1[%11] : memref<16xi32, #tpu.memory_space<smem>>
    %13 = arith.index_cast %12 : i32 to index
    %c0_4 = arith.constant 0 : index
    %14 = vector.load %arg4[%13, %c0_4] : memref<96x128xf32, #tpu.memory_space<vmem>>, vector<1x128xf32>
    %c1 = arith.constant 1 : index
    %c0_5 = arith.constant 0 : index
    %15 = vector.load %arg5[%c1, %c0_5] : memref<8x128xf32, #tpu.memory_space<vmem>>, vector<1x128xf32>
    tpu.vector_store %arg5[%c1, %c0_5], %14 {strides = array<i32>} : memref<8x128xf32, #tpu.memory_space<vmem>>, vector<1x128xf32>,
    %c2_i32 = arith.constant 2 : i32
    %16 = arith.addi %3, %c2_i32 : i32
    %17 = arith.index_cast %16 : i32 to index
    %18 = memref.load %arg1[%17] : memref<16xi32, #tpu.memory_space<smem>>
    %19 = arith.index_cast %18 : i32 to index
    %c0_6 = arith.constant 0 : index
    %20 = vector.load %arg4[%19, %c0_6] : memref<96x128xf32, #tpu.memory_space<vmem>>, vector<1x128xf32>
    %c2 = arith.constant 2 : index
    %c0_7 = arith.constant 0 : index
    %21 = vector.load %arg5[%c2, %c0_7] : memref<8x128xf32, #tpu.memory_space<vmem>>, vector<1x128xf32>
    tpu.vector_store %arg5[%c2, %c0_7], %20 {strides = array<i32>} : memref<8x128xf32, #tpu.memory_space<vmem>>, vector<1x128xf32>,
    %c3_i32 = arith.constant 3 : i32
    %22 = arith.addi %3, %c3_i32 : i32
    %23 = arith.index_cast %22 : i32 to index
    %24 = memref.load %arg1[%23] : memref<16xi32, #tpu.memory_space<smem>>
    %25 = arith.index_cast %24 : i32 to index
    %c0_8 = arith.constant 0 : index
    %26 = vector.load %arg4[%25, %c0_8] : memref<96x128xf32, #tpu.memory_space<vmem>>, vector<1x128xf32>
    %c3 = arith.constant 3 : index
    %c0_9 = arith.constant 0 : index
    %27 = vector.load %arg5[%c3, %c0_9] : memref<8x128xf32, #tpu.memory_space<vmem>>, vector<1x128xf32>
    tpu.vector_store %arg5[%c3, %c0_9], %26 {strides = array<i32>} : memref<8x128xf32, #tpu.memory_space<vmem>>, vector<1x128xf32>,
    %c4_i32 = arith.constant 4 : i32
    %28 = arith.addi %3, %c4_i32 : i32
    %29 = arith.index_cast %28 : i32 to index
    %30 = memref.load %arg1[%29] : memref<16xi32, #tpu.memory_space<smem>>
    %31 = arith.index_cast %30 : i32 to index
    %c0_10 = arith.constant 0 : index
    %32 = vector.load %arg4[%31, %c0_10] : memref<96x128xf32, #tpu.memory_space<vmem>>, vector<1x128xf32>
    %c4 = arith.constant 4 : index
    %c0_11 = arith.constant 0 : index
    %33 = vector.load %arg5[%c4, %c0_11] : memref<8x128xf32, #tpu.memory_space<vmem>>, vector<1x128xf32>
    tpu.vector_store %arg5[%c4, %c0_11], %32 {strides = array<i32>} : memref<8x128xf32, #tpu.memory_space<vmem>>, vector<1x128xf32>,
    %c5_i32 = arith.constant 5 : i32
    %34 = arith.addi %3, %c5_i32 : i32
    %35 = arith.index_cast %34 : i32 to index
    %36 = memref.load %arg1[%35] : memref<16xi32, #tpu.memory_space<smem>>
    %37 = arith.index_cast %36 : i32 to index
    %c0_12 = arith.constant 0 : index
    %38 = vector.load %arg4[%37, %c0_12] : memref<96x128xf32, #tpu.memory_space<vmem>>, vector<1x128xf32>
    %c5 = arith.constant 5 : index
    %c0_13 = arith.constant 0 : index
    %39 = vector.load %arg5[%c5, %c0_13] : memref<8x128xf32, #tpu.memory_space<vmem>>, vector<1x128xf32>
    tpu.vector_store %arg5[%c5, %c0_13], %38 {strides = array<i32>} : memref<8x128xf32, #tpu.memory_space<vmem>>, vector<1x128xf32>,
    %c6_i32 = arith.constant 6 : i32
    %40 = arith.addi %3, %c6_i32 : i32
    %41 = arith.index_cast %40 : i32 to index
    %42 = memref.load %arg1[%41] : memref<16xi32, #tpu.memory_space<smem>>
    %43 = arith.index_cast %42 : i32 to index
    %c0_14 = arith.constant 0 : index
    %44 = vector.load %arg4[%43, %c0_14] : memref<96x128xf32, #tpu.memory_space<vmem>>, vector<1x128xf32>
    %c6 = arith.constant 6 : index
    %c0_15 = arith.constant 0 : index
    %45 = vector.load %arg5[%c6, %c0_15] : memref<8x128xf32, #tpu.memory_space<vmem>>, vector<1x128xf32>
    tpu.vector_store %arg5[%c6, %c0_15], %44 {strides = array<i32>} : memref<8x128xf32, #tpu.memory_space<vmem>>, vector<1x128xf32>,
    %c7_i32 = arith.constant 7 : i32
    %46 = arith.addi %3, %c7_i32 : i32
    %47 = arith.index_cast %46 : i32 to index
    %48 = memref.load %arg1[%47] : memref<16xi32, #tpu.memory_space<smem>>
    %49 = arith.index_cast %48 : i32 to index
    %c0_16 = arith.constant 0 : index
    %50 = vector.load %arg4[%49, %c0_16] : memref<96x128xf32, #tpu.memory_space<vmem>>, vector<1x128xf32>
    %c7 = arith.constant 7 : index
    %c0_17 = arith.constant 0 : index
    %51 = vector.load %arg5[%c7, %c0_17] : memref<8x128xf32, #tpu.memory_space<vmem>>, vector<1x128xf32>
    tpu.vector_store %arg5[%c7, %c0_17], %50 {strides = array<i32>} : memref<8x128xf32, #tpu.memory_space<vmem>>, vector<1x128xf32>,
    %c0_18 = arith.constant 0 : index
    %c0_19 = arith.constant 0 : index
    %52 = vector.load %arg5[%c0_18, %c0_19] : memref<8x128xf32, #tpu.memory_space<vmem>>, vector<8x128xf32>
    %53 = math.tanh %52 : vector<8x128xf32>
    %c0_20 = arith.constant 0 : index
    %c0_21 = arith.constant 0 : index
    %54 = vector.load %arg3[%c0_20, %c0_21] : memref<8x128xf32, #tpu.memory_space<vmem>>, vector<8x128xf32>
    tpu.vector_store %arg3[%c0_20, %c0_21], %53 {strides = array<i32>} : memref<8x128xf32, #tpu.memory_space<vmem>>, vector<8x128xf32>,
    return
  }
  func.func @transform_1(%arg0: i32, %arg1: memref<16xi32, #tpu.memory_space<smem>>) -> (i32, i32) {
    %c0_i32 = arith.constant 0 : i32
    %c0_i32_0 = arith.constant 0 : i32
    return %arg0, %c0_i32 : i32, i32
  }
}

</mosaic_0001>

<llo_original>
// kernel: tpu_custom_call.1
$region0: #{tpu_custom_call.1}
  #allocation0 [shape = 'u32[]', space=smem, size = 0x4, offset = 0x4, fixed_abs, tag = 'smem constant byte address 0x4 - core index']
  #allocation1 [shape = 'u32[144,128]{1,0:T(1,128)}', space=vmem, size = 0x12000, scoped, tag = 'internal scratch']
  #allocation2 [shape = 'f32[96,128]{1,0:T(8,128)}', space=vmem, size = 0xc000, scoped, tag = 'scratch operand']
  #allocation3 [shape = 'f32[8,128]{1,0:T(8,128)}', space=vmem, size = 0x1000, scoped, tag = 'scratch operand']
  #allocation4 [shape = 's32[1]{0}', space=sflag, size = 0x4, scoped, tag = 'scratch operand']
  #allocation5 [shape = 's32[1]{0}', space=sflag, size = 0x4, scoped, tag = 'scoped memory for tpu_custom_call.1']
  #allocation6 [shape = 'u8[512]{0}', space=smem, size = 0x200, scoped, tag = 'prefetched SMEM operand 0']
  #allocation9 [shape = 's32[]', space=sflag, size = 0x4, offset = 0, fixed_abs, tag = 'sflag constant byte address 0x0 - dummy sync flag']
  #allocation10 [shape = 's32[]', space=sflag, size = 0x4, offset = 0, fixed_abs, tag = 'sflag constant byte address 0x0 - dummy sync flag']
  #allocation11 [shape = 'u32[]', space=smem, size = 0x4, offset = 0x44, fixed_abs, tag = 'smem constant byte address 0x44 - assertion arg 0']
  #allocation12 [shape = 'u32[]', space=smem, size = 0x4, offset = 0x48, fixed_abs, tag = 'smem constant byte address 0x48 - assertion arg 1']
  %s0 = inlined_call_operand.hbm [shape: s32[16], index: 0, kind: input, shape index: {}]
  %s1 = inlined_call_operand.hbm [shape: f32[96,128], index: 1, kind: input, shape index: {}]
  %s2 = inlined_call_operand.hbm [shape: f32[16,128], index: 2, kind: output, shape index: {}]
  %s3 = sld [smem:[#allocation0]]
  $region33: #{tpu_custom_call.1} parent=0
    _
  %s5 = ssub.s32 1, %s3
  %s6 = scalar_select 0, %s5, %s3
  %8 = dma.hbm_to_smem %s0, 16, [#allocation6], [#allocation5]
  %9 = dma.done [#allocation5], 16
  %10 = sfence
  $region1: #{tpu_custom_call.1} parent=0
    #allocation7 [shape = 'u8[8192]{0}', space=vmem, size = 0x2000, scoped, tag = 'output window, operand 0']
    #allocation8 [shape = 's32[2]{0}', space=sflag, size = 0x8, scoped, tag = 'scoped memory for tpu_custom_call.1']
    %11 = vsyncpa [#allocation8], 0
    %s12 = scalar_lea.sflag [#allocation8], 1
    %13 = vsyncpa %s12, 0
    loop: start=0, step=1, limit=3
    $region2: #{tpu_custom_call.1} parent=1 // loop_pre_header
      _
    $region3: #{tpu_custom_call.1} parent=1 // loop_header
      %s15 = sphi 0, %s19
      %p16 = scmp.ge.s32.totalorder %s15, 3
      %s24 = sphi 0, %s26
      %s27 = sphi 0, %s24
      %s37 = sphi 0, %s27
    $region4: #{tpu_custom_call.1} parent=1 // loop_header_branch
      %18 = sbr.rel (%p16) target = $region8
    $region5: #{tpu_custom_call.1} parent=1 // loop_body
      %s20 = ssub.s32 %s15, 1
      %s21 = sadd.s32 %s15, 1
      %s22 = ssub.s32 %s15, %s21
      %p23 = scmp.eq.s32.totalorder %s22, 0
      %s25 = sadd.s32 %s24, 1
      %s26 = scalar_select %p23, %s24, %s25
      %p28 = pneg %p23
      %p29 = scmp.eq.s32.totalorder %s15, 1
      %p30 = por %p28, %p29
      %p31 = scmp.ne.s32.totalorder %s24, %s27
      %p32 = scmp.eq.s32.totalorder %s15, 0
      %p33 = por %p31, %p32
      %p34 = scmp.ne.s32.totalorder %s24, %s27
      %p35 = scmp.eq.s32.totalorder %s20, 1
      %p36 = por %p34, %p35
      %p38 = scmp.ne.s32.totalorder %s27, %s37
      %p39 = scmp.eq.s32.totalorder %s20, 0
      %p40 = por %p38, %p39
      %p41 = scmp.lt.s32.totalorder %s15, 2
      // Predicated region
      $region9: #{tpu_custom_call.1} parent=5 // pred_check
        %p42 = pneg %p41
      $region10: #{tpu_custom_call.1} parent=5 // pred_check_branch
        %44 = sbr.rel (%p42) target = $region12
      $region11: #{tpu_custom_call.1} parent=5 // pred_region
        %p45 = pneg %p33
        %p46 = pneg %p30
        %s47 = sand.u32 %s24, 1
        %s48 = scalar_lea.sflag [#allocation8], %s47
        %s49 = sand.u32 %s24, 1
        %s50 = smul.addr %s49, 8
        %s51 = scalar_lea.vmem [#allocation7], %s50
        %p52 = scmp.eq.s32.totalorder %s15, 0
        // Predicated region
        $region13: #{tpu_custom_call.1} parent=11 // pred_check
          %p53 = pneg %p52
        $region14: #{tpu_custom_call.1} parent=11 // pred_check_branch
          %55 = sbr.rel (%p53) target = $region16
        $region15: #{tpu_custom_call.1} parent=11 // pred_region
          // Predicated region
          $region17: #{tpu_custom_call.1} parent=15 // pred_check
            _
          $region18: #{tpu_custom_call.1} parent=15 // pred_check_branch
            %57 = sbr.rel target = $region20
          $region19: #{tpu_custom_call.1} parent=15 // pred_region
            %58 = sst [smem:[#allocation11]] [#allocation10]
            %59 = sst [smem:[#allocation12]] [#allocation9]
          $region20: #{tpu_custom_call.1} parent=15 // pred_fallthru
            _
          %61 = shalt.err (0)
          %s63 = sshll.u32 [#allocation2], 4
          %s64 = int_to_ptr.vmem [resolvable:$true] %s63
          %66 = dma.hbm_to_vmem [thread:$0]  %s1, 1536, %s64, [#allocation4]
          %s67 = smul.u32 96, 1
          %s68 = sshll.u32 %s67, 4
          %69 = dma.done [#allocation4], %s68
        $region16: #{tpu_custom_call.1} parent=11 // pred_fallthru
          _
        %s70 = smul.u32 %s15, 8
        %s71 = sld [smem:[#allocation6 + %s70]]
        %s72 = scalar_lea.vmem [#allocation2], %s71
        %v73 = vld [vmem:[%s72] sm:$0x1]
        %74 = vst [vmem:[#allocation3] sm:$0x1] %v73
        %s75 = sadd.s32 %s70, 1
        %s76 = sld [smem:[#allocation6 + %s75]]
        %s77 = scalar_lea.vmem [#allocation2], %s76
        %v78 = vld [vmem:[%s77] sm:$0x1]
        %79 = vst [vmem:[#allocation3 + $0x1] sm:$0x1] %v78
        %s80 = sadd.s32 %s70, 2
        %s81 = sld [smem:[#allocation6 + %s80]]
        %s82 = scalar_lea.vmem [#allocation2], %s81
        %v83 = vld [vmem:[%s82] sm:$0x1]
        %84 = vst [vmem:[#allocation3 + $0x2] sm:$0x1] %v83
        %s85 = sadd.s32 %s70, 3
        %s86 = sld [smem:[#allocation6 + %s85]]
        %s87 = scalar_lea.vmem [#allocation2], %s86
        %v88 = vld [vmem:[%s87] sm:$0x1]
        %89 = vst [vmem:[#allocation3 + $0x3] sm:$0x1] %v88
        %s90 = sadd.s32 %s70, 4
        %s91 = sld [smem:[#allocation6 + %s90]]
        %s92 = scalar_lea.vmem [#allocation2], %s91
        %v93 = vld [vmem:[%s92] sm:$0x1]
        %94 = vst [vmem:[#allocation3 + $0x4] sm:$0x1] %v93
        %s95 = sadd.s32 %s70, 5
        %s96 = sld [smem:[#allocation6 + %s95]]
        %s97 = scalar_lea.vmem [#allocation2], %s96
        %v98 = vld [vmem:[%s97] sm:$0x1]
        %99 = vst [vmem:[#allocation3 + $0x5] sm:$0x1] %v98
        %s100 = sadd.s32 %s70, 6
        %s101 = sld [smem:[#allocation6 + %s100]]
        %s102 = scalar_lea.vmem [#allocation2], %s101
        %v103 = vld [vmem:[%s102] sm:$0x1]
        %104 = vst [vmem:[#allocation3 + $0x6] sm:$0x1] %v103
        %s105 = sadd.s32 %s70, 7
        %s106 = sld [smem:[#allocation6 + %s105]]
        %s107 = scalar_lea.vmem [#allocation2], %s106
        %v108 = vld [vmem:[%s107] sm:$0x1]
        %109 = vst [vmem:[#allocation3 + $0x7] sm:$0x1] %v108
        %v110 = vld [vmem:[#allocation3] sm:$0xff]
        %v111 = vtanh.pop %v110
        %112 = vst [vmem:[%s51] sm:$0xff] %v111
        %s113 = sand.u32 %s24, 1
        %s114 = scalar_lea.sflag [#allocation8], %s113
        %s115 = sand.u32 %s24, 1
        %s116 = smul.addr %s115, 8
        %s117 = scalar_lea.vmem [#allocation7], %s116
        // Predicated region
        $region21: #{tpu_custom_call.1} parent=11 // pred_check
          %p118 = pneg %p30
        $region22: #{tpu_custom_call.1} parent=11 // pred_check_branch
          %120 = sbr.rel (%p118) target = $region24
        $region23: #{tpu_custom_call.1} parent=11 // pred_region
          %s122 = ssub.s32 128, 128
          %123 = vsyncadd %s114, %s122
          %s124 = smul.addr %s15, 128
          %s125 = scalar_lea.hbm %s2, %s124
          %s127 = sshll.u32 %s117, 4
          %s128 = int_to_ptr.vmem [resolvable:$true] %s127
          %130 = dma.vmem_to_hbm [thread:$0]  %s128, 128, %s125, %s114
        $region24: #{tpu_custom_call.1} parent=11 // pred_fallthru
          _
      $region12: #{tpu_custom_call.1} parent=5 // pred_fallthru
        _
      %p131 = scmp.le.s32.totalorder 1, %s15
      // Predicated region
      $region25: #{tpu_custom_call.1} parent=5 // pred_check
        %p132 = pneg %p131
      $region26: #{tpu_custom_call.1} parent=5 // pred_check_branch
        %134 = sbr.rel (%p132) target = $region28
      $region27: #{tpu_custom_call.1} parent=5 // pred_region
        %s135 = ssub.s32 %s15, 1
        // Predicated region
        $region29: #{tpu_custom_call.1} parent=27 // pred_check
          %p136 = pneg %p36
        $region30: #{tpu_custom_call.1} parent=27 // pred_check_branch
          %138 = sbr.rel (%p136) target = $region32
        $region31: #{tpu_custom_call.1} parent=27 // pred_region
          %s139 = sand.u32 %s27, 1
          %s140 = scalar_lea.sflag [#allocation8], %s139
          %s141 = sand.u32 %s27, 1
          %s142 = smul.addr %s141, 8
          %s143 = scalar_lea.vmem [#allocation7], %s142
          %144 = dma.done %s140, 128
        $region32: #{tpu_custom_call.1} parent=27 // pred_fallthru
          _
      $region28: #{tpu_custom_call.1} parent=5 // pred_fallthru
        _
    $region6: #{tpu_custom_call.1} parent=1 // loop_footer
      %s19 = sadd.s32 1, %s15
    $region7: #{tpu_custom_call.1} parent=1 // loop_footer_branch
      %14 = sbr.rel target = $region3
    $region8: #{tpu_custom_call.1} parent=1 // loop_exit
      _
    %145 = vsyncpa [#allocation8], 1
    %s146 = scalar_lea.sflag [#allocation8], 1
    %147 = vsyncpa %s146, 1
  %148 = vsyncmov [#allocation4]
  %s149 = vpop.sfrf %148
  %p150 = scmp.eq.s32.totalorder %s149, 0
  %p151 = pneg %p150
  %153 = shalt.err (%p151)

</llo_original>
